<compile_context>
chip_gen: v5e
topology: v5e:2x2
jax: 0.10.0
libtpu: 0.0.40
codegen_flags: <defaults>
</compile_context>

<pallas_src>
import math

import jax
import jax.numpy as jnp
from jax.experimental import pallas as pl
from jax.experimental.pallas import tpu as pltpu


def _gelu_exact(v):
    # torch.nn.functional.gelu default: 0.5 * x * (1 + erf(x / sqrt(2)))
    return 0.5 * v * (1.0 + jax.lax.erf(v * (1.0 / math.sqrt(2.0))))


# ---------------------------------------------------------------------------
# Kernel 1: encoder + reparametrize + classifier + decoder (single block).
# Outputs packed into one lane-dense slab [recon | mu | logvar | z | logits | 0]
# so the store path is a full-width unmasked store instead of several <128-lane
# masked partial stores.
# ---------------------------------------------------------------------------
def vae_main_kernel(
    x_ref, eps_ref,
    w1_ref, b1_ref, w2_ref, b2_ref,
    w2122_ref, b2122_ref,
    w3_ref, b3_ref, w4_ref, b4_ref,
    wc_ref, bc_ref, ln_g_ref, ln_b_ref,
    slab_ref,
):
    f32 = jnp.float32
    x = x_ref[...]
    n = x.shape[0]

    # ---------------- encode ----------------
    h = jnp.dot(x, w1_ref[...], preferred_element_type=f32) + b1_ref[...]
    h = _gelu_exact(h)
    # LayerNorm(200, eps=1e-6), biased variance like torch
    mean = jnp.mean(h, axis=-1, keepdims=True)
    var = jnp.mean((h - mean) ** 2, axis=-1, keepdims=True)
    h = (h - mean) * jax.lax.rsqrt(var + 1e-6) * ln_g_ref[...] + ln_b_ref[...]
    # dropout(p=0.0) -> identity (asserted in the wrapper)
    h = jnp.dot(h, w2_ref[...], preferred_element_type=f32) + b2_ref[...]
    h = _gelu_exact(h)
    # fc21 | fc22 fused into one GEMM (shared LHS)
    ml = jnp.dot(h, w2122_ref[...], preferred_element_type=f32) + b2122_ref[...]
    nlat = ml.shape[1] // 2
    mu = ml[:, :nlat]
    logvar = ml[:, nlat:]

    # ---------------- reparametrize ----------------
    z = eps_ref[...] * jnp.exp(0.5 * logvar) + mu

    # ---------------- classifier + log_softmax ----------------
    s = jnp.dot(z, wc_ref[...], preferred_element_type=f32) + bc_ref[...]
    s = s - jnp.max(s, axis=-1, keepdims=True)
    logits = s - jnp.log(jnp.sum(jnp.exp(s), axis=-1, keepdims=True))

    # ---------------- decode ----------------
    d = jnp.dot(z, w3_ref[...], preferred_element_type=f32) + b3_ref[...]
    d = _gelu_exact(d)
    d = jnp.dot(d, w4_ref[...], preferred_element_type=f32) + b4_ref[...]
    recon = jax.nn.sigmoid(d)

    # ---------------- one lane-dense output slab ----------------
    pieces = [recon, mu, logvar, z, logits]
    used = sum(p.shape[1] for p in pieces)
    pad = slab_ref.shape[1] - used
    if pad > 0:
        pieces.append(jnp.zeros((n, pad), f32))
    slab_ref[...] = jnp.concatenate(pieces, axis=1)


# ---------------------------------------------------------------------------
# Kernel 2: get_feature_dis(z) tiled over a (row-tile, col-tile) parallel grid.
# ---------------------------------------------------------------------------
def xdis_kernel(zr_ref, zc_ref, out_ref):
    f32 = jnp.float32
    zr = zr_ref[...]
    zc = zc_ref[...]
    # Cosine similarity via row-normalisation (rsqrt -> EUP) on the small
    # (tile, nlatent) operands, then a single MXU contraction.  No rank-1
    # outer product, no NxN divide, no NxN denominator temporary.
    zr = zr * jax.lax.rsqrt(jnp.sum(zr * zr, axis=1, keepdims=True))
    zc = zc * jax.lax.rsqrt(jnp.sum(zc * zc, axis=1, keepdims=True))
    xdis = jax.lax.dot_general(zr, zc, (((1,), (1,)), ((), ())),
                               preferred_element_type=f32)
    tm, tn = out_ref.shape
    rows = jax.lax.broadcasted_iota(jnp.int32, (tm, tn), 0) + pl.program_id(0) * tm
    cols = jax.lax.broadcasted_iota(jnp.int32, (tm, tn), 1) + pl.program_id(1) * tn
    out_ref[...] = jnp.where(rows == cols, 0.0, xdis)


# ---------------------------------------------------------------------------
# Wrapper
# ---------------------------------------------------------------------------
def _round_up(v, m):
    return ((v + m - 1) // m) * m


def _pick_tile(n):
    # Largest "nice" tile that divides n; otherwise use the full extent
    # (a block equal to the full array dim always satisfies the tiling rules).
    for t in (512, 256, 128):
        if n % t == 0:
            return t
    return n


def _vmem_limit(nbytes, lo=32 << 20, hi=64 << 20):
    # Cap at 64 MiB so the request is valid on v7x's smaller per-core VMEM.
    return int(min(hi, max(lo, 4 * nbytes)))


def _vae_forward_impl(params, x, eps):
    f32 = jnp.float32
    N, nfeat = x.shape
    nlatent = params["w21"].shape[1]
    nclass = params["wc"].shape[1]

    # Fuse fc21 / fc22 (shared LHS) into a single GEMM weight.
    w2122 = jnp.concatenate([params["w21"], params["w22"]], axis=1)
    b2122 = jnp.concatenate([params["b21"], params["b22"]], axis=1)

    slab_w = _round_up(nfeat + 3 * nlatent + nclass, 128)

    args = (
        x, eps,
        params["w1"], params["b1"], params["w2"], params["b2"],
        w2122, b2122,
        params["w3"], params["b3"], params["w4"], params["b4"],
        params["wc"], params["bc"], params["ln_g"], params["ln_b"],
    )
    vmem = pl.BlockSpec(memory_space=pltpu.MemorySpace.VMEM)
    main_bytes = sum(int(a.size) * 4 for a in args) + N * slab_w * 4 + N * 200 * 4 * 3

    slab = pl.pallas_call(
        vae_main_kernel,
        out_shape=jax.ShapeDtypeStruct((N, slab_w), f32),
        in_specs=[vmem] * len(args),
        out_specs=vmem,
        compiler_params=pltpu.CompilerParams(
            vmem_limit_bytes=_vmem_limit(main_bytes)),
    )(*args)

    recon = slab[:, :nfeat]
    mu = slab[:, nfeat:nfeat + nlatent]
    logvar = slab[:, nfeat + nlatent:nfeat + 2 * nlatent]
    z = slab[:, nfeat + 2 * nlatent:nfeat + 3 * nlatent]
    logits = slab[:, nfeat + 3 * nlatent:nfeat + 3 * nlatent + nclass]

    # ---- x_dis on a (row-tile, col-tile) parallel grid ----
    tm = _pick_tile(N)
    tn = _pick_tile(N)
    xdis_bytes = 2 * 4 * (tm * nlatent + tn * nlatent + tm * tn)
    xdis = pl.pallas_call(
        xdis_kernel,
        out_shape=jax.ShapeDtypeStruct((N, N), f32),
        grid=(N // tm, N // tn),
        in_specs=[pl.BlockSpec((tm, nlatent), lambda i, j: (i, 0)),
                  pl.BlockSpec((tn, nlatent), lambda i, j: (j, 0))],
        out_specs=pl.BlockSpec((tm, tn), lambda i, j: (i, j)),
        compiler_params=pltpu.CompilerParams(
            dimension_semantics=("parallel", "parallel"),
            vmem_limit_bytes=_vmem_limit(xdis_bytes)),
    )(z, z)

    return recon, mu, logvar, logits, xdis, z


_vae_forward_jit = jax.jit(_vae_forward_impl)


def vae_forward(params, x, eps, dropout_p=0.0):
    """Fused VAE training-mode forward (recon, mu, logvar, log-probs, x_dis, z)."""
    # TODO(synk): non-zero dropout probability would need pltpu.prng_random_bits masking.
    assert dropout_p == 0.0, "kernel implements Dropout(p=0.0) (identity) only"
    return _vae_forward_jit(params, x, eps)


# ---------------- pure-JAX reference (sanity check) ----------------
def vae_forward_ref(params, x, eps):
    h = _gelu_exact(x @ params["w1"] + params["b1"])
    mean = jnp.mean(h, axis=-1, keepdims=True)
    var = jnp.mean((h - mean) ** 2, axis=-1, keepdims=True)
    h = (h - mean) * jax.lax.rsqrt(var + 1e-6) * params["ln_g"] + params["ln_b"]
    h = _gelu_exact(h @ params["w2"] + params["b2"])
    mu = h @ params["w21"] + params["b21"]
    logvar = h @ params["w22"] + params["b22"]
    z = eps * jnp.exp(0.5 * logvar) + mu
    zz = z @ z.T
    norm = jnp.sqrt(jnp.sum(z * z, axis=1, keepdims=True))
    xdis = zz / (norm @ norm.T)
    xdis = (1.0 - jnp.eye(z.shape[0], dtype=z.dtype)) * xdis
    s = z @ params["wc"] + params["bc"]
    logits = jax.nn.log_softmax(s, axis=1)
    d = _gelu_exact(z @ params["w3"] + params["b3"])
    recon = jax.nn.sigmoid(d @ params["w4"] + params["b4"])
    return recon, mu, logvar, logits, xdis, z


def _xavier_uniform(key, fan_in, fan_out):
    bound = math.sqrt(6.0 / (fan_in + fan_out))
    return jax.random.uniform(key, (fan_in, fan_out), jnp.float32, -bound, bound)


def init_params(key, nfeat, nhid, nclass, nlatent):
    ks = jax.random.split(key, 16)
    p = {}
    p["w1"] = _xavier_uniform(ks[0], nfeat, 200)
    p["b1"] = 1e-6 * jax.random.normal(ks[1], (1, 200), jnp.float32)
    p["w2"] = _xavier_uniform(ks[2], 200, nhid)
    p["b2"] = 1e-6 * jax.random.normal(ks[3], (1, nhid), jnp.float32)
    p["w21"] = _xavier_uniform(ks[4], nhid, nlatent)
    p["b21"] = 1e-6 * jax.random.normal(ks[5], (1, nlatent), jnp.float32)
    p["w22"] = _xavier_uniform(ks[6], nhid, nlatent)
    p["b22"] = 1e-6 * jax.random.normal(ks[7], (1, nlatent), jnp.float32)
    p["w3"] = _xavier_uniform(ks[8], nlatent, 200)
    p["b3"] = 1e-6 * jax.random.normal(ks[9], (1, 200), jnp.float32)
    p["w4"] = _xavier_uniform(ks[10], 200, nfeat)
    p["b4"] = 1e-6 * jax.random.normal(ks[11], (1, nfeat), jnp.float32)
    p["wc"] = _xavier_uniform(ks[12], nlatent, nclass)
    p["bc"] = 1e-6 * jax.random.normal(ks[13], (1, nclass), jnp.float32)
    p["ln_g"] = jnp.ones((1, 200), jnp.float32)
    p["ln_b"] = jnp.zeros((1, 200), jnp.float32)
    return p


if __name__ == "__main__":
    N, nfeat, nhid, nclass, nlatent = 8, 64, 32, 8, 16

    key = jax.random.PRNGKey(0)
    kp, kx, ke = jax.random.split(key, 3)
    params = init_params(kp, nfeat, nhid, nclass, nlatent)
    x = jax.random.normal(kx, (N, nfeat), jnp.float32)
    eps = jax.random.normal(ke, (N, nlatent), jnp.float32)  # reparametrization noise

    outs = jax.block_until_ready(vae_forward(params, x, eps))
    refs = jax.block_until_ready(vae_forward_ref(params, x, eps))

    names = ["recon", "mu", "logvar", "class_logits", "x_dis", "z"]
    for name, o, r in zip(names, outs, refs):
        assert o.shape == r.shape, (name, o.shape, r.shape)
        assert bool(jnp.all(jnp.isfinite(o))), name
        assert bool(jnp.allclose(o, r, rtol=5e-3, atol=5e-3)), name

    print("KERNEL_OK")
</pallas_src>

<mosaic_0001>
module attributes {stable_mosaic.version = 11 : i64} {
  func.func @xdis_kernel(%arg0: i32, %arg1: i32, %arg2: memref<8x16xf32, #tpu.memory_space<vmem>>, %arg3: memref<8x16xf32, #tpu.memory_space<vmem>>, %arg4: memref<8x8xf32, #tpu.memory_space<vmem>>) attributes {dimension_semantics = [#tpu.dimension_semantics<parallel>, #tpu.dimension_semantics<parallel>], iteration_bounds = array<i64: 1, 1>, scalar_prefetch = 0 : i64, scratch_operands = 0 : i64, tpu.core_type = #tpu.core_type<tc>, window_params = [{transform_indices = @transform_0, window_bounds = array<i64: 8, 16>}, {transform_indices = @transform_1, window_bounds = array<i64: 8, 16>}, {transform_indices = @transform_2, window_bounds = array<i64: 8, 8>}]} {
    %c0 = arith.constant 0 : index
    %c0_0 = arith.constant 0 : index
    %0 = vector.load %arg2[%c0, %c0_0] : memref<8x16xf32, #tpu.memory_space<vmem>>, vector<8x16xf32>
    %c0_1 = arith.constant 0 : index
    %c0_2 = arith.constant 0 : index
    %1 = vector.load %arg3[%c0_1, %c0_2] : memref<8x16xf32, #tpu.memory_space<vmem>>, vector<8x16xf32>
    %2 = arith.mulf %0, %0 : vector<8x16xf32>
    %cst = arith.constant dense<0.000000e+00> : vector<8xf32>
    %3 = vector.multi_reduction <add>, %2, %cst [1] : vector<8x16xf32> to vector<8xf32>
    %4 = vector.shape_cast %3 : vector<8xf32> to vector<8x1xf32>
    %5 = math.rsqrt %4 : vector<8x1xf32>
    %6 = vector.broadcast %5 : vector<8x1xf32> to vector<8x16xf32>
    %7 = arith.mulf %0, %6 : vector<8x16xf32>
    %8 = arith.mulf %1, %1 : vector<8x16xf32>
    %cst_3 = arith.constant dense<0.000000e+00> : vector<8xf32>
    %9 = vector.multi_reduction <add>, %8, %cst_3 [1] : vector<8x16xf32> to vector<8xf32>
    %10 = vector.shape_cast %9 : vector<8xf32> to vector<8x1xf32>
    %11 = math.rsqrt %10 : vector<8x1xf32>
    %12 = vector.broadcast %11 : vector<8x1xf32> to vector<8x16xf32>
    %13 = arith.mulf %1, %12 : vector<8x16xf32>
    %cst_4 = arith.constant dense<0.000000e+00> : vector<8x8xf32>
    %14 = tpu.matmul %7, %13, %cst_4 {dimension_numbers = #tpu.dot_dimension_numbers<[1], [1], [0], [0], [0, 0, 1, 0], [], []>} : vector<8x16xf32>, vector<8x16xf32>, vector<8x8xf32> -> vector<8x8xf32>
    %15 = tpu.iota {dimensions = array<i32: 0>} : vector<8x8xi32>
    %c8_i32 = arith.constant 8 : i32
    %16 = arith.muli %arg0, %c8_i32 : i32
    %17 = vector.broadcast %16 : i32 to vector<8x8xi32>
    %18 = arith.addi %15, %17 : vector<8x8xi32>
    %19 = tpu.iota {dimensions = array<i32: 1>} : vector<8x8xi32>
    %c8_i32_5 = arith.constant 8 : i32
    %20 = arith.muli %arg1, %c8_i32_5 : i32
    %21 = vector.broadcast %20 : i32 to vector<8x8xi32>
    %22 = arith.addi %19, %21 : vector<8x8xi32>
    %23 = arith.cmpi eq, %18, %22 : vector<8x8xi32>
    %cst_6 = arith.constant 0.000000e+00 : f32
    %24 = vector.broadcast %cst_6 : f32 to vector<8x8xf32>
    %25 = arith.select %23, %24, %14 : vector<8x8xi1>, vector<8x8xf32>
    %c0_7 = arith.constant 0 : index
    %c0_8 = arith.constant 0 : index
    %26 = vector.load %arg4[%c0_7, %c0_8] : memref<8x8xf32, #tpu.memory_space<vmem>>, vector<8x8xf32>
    tpu.vector_store %arg4[%c0_7, %c0_8], %25 {strides = array<i32>} : memref<8x8xf32, #tpu.memory_space<vmem>>, vector<8x8xf32>,
    return
  }
  func.func @transform_0(%arg0: i32, %arg1: i32) -> (i32, i32) {
    %c0_i32 = arith.constant 0 : i32
    %c0_i32_0 = arith.constant 0 : i32
    return %arg0, %c0_i32 : i32, i32
  }
  func.func @transform_1(%arg0: i32, %arg1: i32) -> (i32, i32) {
    %c0_i32 = arith.constant 0 : i32
    %c0_i32_0 = arith.constant 0 : i32
    return %arg1, %c0_i32 : i32, i32
  }
  func.func @transform_2(%arg0: i32, %arg1: i32) -> (i32, i32) {
    %c0_i32 = arith.constant 0 : i32
    return %arg0, %arg1 : i32, i32
  }
}

module attributes {stable_mosaic.version = 11 : i64} {
  func.func @vae_main_kernel(%arg0: memref<8x64xf32, #tpu.memory_space<vmem>>, %arg1: memref<8x16xf32, #tpu.memory_space<vmem>>, %arg2: memref<64x200xf32, #tpu.memory_space<vmem>>, %arg3: memref<1x200xf32, #tpu.memory_space<vmem>>, %arg4: memref<200x32xf32, #tpu.memory_space<vmem>>, %arg5: memref<1x32xf32, #tpu.memory_space<vmem>>, %arg6: memref<32x32xf32, #tpu.memory_space<vmem>>, %arg7: memref<1x32xf32, #tpu.memory_space<vmem>>, %arg8: memref<16x200xf32, #tpu.memory_space<vmem>>, %arg9: memref<1x200xf32, #tpu.memory_space<vmem>>, %arg10: memref<200x64xf32, #tpu.memory_space<vmem>>, %arg11: memref<1x64xf32, #tpu.memory_space<vmem>>, %arg12: memref<16x8xf32, #tpu.memory_space<vmem>>, %arg13: memref<1x8xf32, #tpu.memory_space<vmem>>, %arg14: memref<1x200xf32, #tpu.memory_space<vmem>>, %arg15: memref<1x200xf32, #tpu.memory_space<vmem>>, %arg16: memref<8x128xf32, #tpu.memory_space<vmem>>) attributes {dimension_semantics = [], scalar_prefetch = 0 : i64, scratch_operands = 0 : i64, tpu.core_type = #tpu.core_type<tc>} {
    %c0 = arith.constant 0 : index
    %c0_0 = arith.constant 0 : index
    %0 = vector.load %arg0[%c0, %c0_0] : memref<8x64xf32, #tpu.memory_space<vmem>>, vector<8x64xf32>
    %c0_1 = arith.constant 0 : index
    %c0_2 = arith.constant 0 : index
    %1 = vector.load %arg2[%c0_1, %c0_2] : memref<64x200xf32, #tpu.memory_space<vmem>>, vector<64x200xf32>
    %cst = arith.constant dense<0.000000e+00> : vector<8x200xf32>
    %2 = tpu.matmul %0, %1, %cst {dimension_numbers = #tpu.dot_dimension_numbers<[1], [0], [0], [1], [0, 0, 1, 1], [], []>} : vector<8x64xf32>, vector<64x200xf32>, vector<8x200xf32> -> vector<8x200xf32>
    %c0_3 = arith.constant 0 : index
    %c0_4 = arith.constant 0 : index
    %3 = vector.load %arg3[%c0_3, %c0_4] : memref<1x200xf32, #tpu.memory_space<vmem>>, vector<1x200xf32>
    %4 = vector.broadcast %3 : vector<1x200xf32> to vector<8x200xf32>
    %5 = arith.addf %2, %4 : vector<8x200xf32>
    %cst_5 = arith.constant 5.000000e-01 : f32
    %6 = vector.broadcast %cst_5 : f32 to vector<8x200xf32>
    %7 = arith.mulf %6, %5 : vector<8x200xf32>
    %cst_6 = arith.constant 0.707106769 : f32
    %8 = vector.broadcast %cst_6 : f32 to vector<8x200xf32>
    %9 = arith.mulf %5, %8 : vector<8x200xf32>
    %10 = math.erf %9 : vector<8x200xf32>
    %cst_7 = arith.constant 1.000000e+00 : f32
    %11 = vector.broadcast %cst_7 : f32 to vector<8x200xf32>
    %12 = arith.addf %11, %10 : vector<8x200xf32>
    %13 = arith.mulf %7, %12 : vector<8x200xf32>
    %cst_8 = arith.constant dense<0.000000e+00> : vector<8xf32>
    %14 = vector.multi_reduction <add>, %13, %cst_8 [1] : vector<8x200xf32> to vector<8xf32>
    %15 = vector.shape_cast %14 : vector<8xf32> to vector<8x1xf32>
    %cst_9 = arith.constant 2.000000e+02 : f32
    %16 = vector.broadcast %cst_9 : f32 to vector<8x1xf32>
    %17 = arith.divf %15, %16 : vector<8x1xf32>
    %18 = vector.broadcast %17 : vector<8x1xf32> to vector<8x200xf32>
    %19 = arith.subf %13, %18 : vector<8x200xf32>
    %20 = arith.mulf %19, %19 : vector<8x200xf32>
    %cst_10 = arith.constant dense<0.000000e+00> : vector<8xf32>
    %21 = vector.multi_reduction <add>, %20, %cst_10 [1] : vector<8x200xf32> to vector<8xf32>
    %22 = vector.shape_cast %21 : vector<8xf32> to vector<8x1xf32>
    %cst_11 = arith.constant 2.000000e+02 : f32
    %23 = vector.broadcast %cst_11 : f32 to vector<8x1xf32>
    %24 = arith.divf %22, %23 : vector<8x1xf32>
    %25 = vector.broadcast %17 : vector<8x1xf32> to vector<8x200xf32>
    %26 = arith.subf %13, %25 : vector<8x200xf32>
    %cst_12 = arith.constant 9.99999997E-7 : f32
    %27 = vector.broadcast %cst_12 : f32 to vector<8x1xf32>
    %28 = arith.addf %24, %27 : vector<8x1xf32>
    %29 = math.rsqrt %28 : vector<8x1xf32>
    %30 = vector.broadcast %29 : vector<8x1xf32> to vector<8x200xf32>
    %31 = arith.mulf %26, %30 : vector<8x200xf32>
    %c0_13 = arith.constant 0 : index
    %c0_14 = arith.constant 0 : index
    %32 = vector.load %arg14[%c0_13, %c0_14] : memref<1x200xf32, #tpu.memory_space<vmem>>, vector<1x200xf32>
    %33 = vector.broadcast %32 : vector<1x200xf32> to vector<8x200xf32>
    %34 = arith.mulf %31, %33 : vector<8x200xf32>
    %c0_15 = arith.constant 0 : index
    %c0_16 = arith.constant 0 : index
    %35 = vector.load %arg15[%c0_15, %c0_16] : memref<1x200xf32, #tpu.memory_space<vmem>>, vector<1x200xf32>
    %36 = vector.broadcast %35 : vector<1x200xf32> to vector<8x200xf32>
    %37 = arith.addf %34, %36 : vector<8x200xf32>
    %c0_17 = arith.constant 0 : index
    %c0_18 = arith.constant 0 : index
    %38 = vector.load %arg4[%c0_17, %c0_18] : memref<200x32xf32, #tpu.memory_space<vmem>>, vector<200x32xf32>
    %cst_19 = arith.constant dense<0.000000e+00> : vector<8x32xf32>
    %39 = tpu.matmul %37, %38, %cst_19 {dimension_numbers = #tpu.dot_dimension_numbers<[1], [0], [0], [1], [0, 0, 1, 1], [], []>} : vector<8x200xf32>, vector<200x32xf32>, vector<8x32xf32> -> vector<8x32xf32>
    %c0_20 = arith.constant 0 : index
    %c0_21 = arith.constant 0 : index
    %40 = vector.load %arg5[%c0_20, %c0_21] : memref<1x32xf32, #tpu.memory_space<vmem>>, vector<1x32xf32>
    %41 = vector.broadcast %40 : vector<1x32xf32> to vector<8x32xf32>
    %42 = arith.addf %39, %41 : vector<8x32xf32>
    %cst_22 = arith.constant 5.000000e-01 : f32
    %43 = vector.broadcast %cst_22 : f32 to vector<8x32xf32>
    %44 = arith.mulf %43, %42 : vector<8x32xf32>
    %cst_23 = arith.constant 0.707106769 : f32
    %45 = vector.broadcast %cst_23 : f32 to vector<8x32xf32>
    %46 = arith.mulf %42, %45 : vector<8x32xf32>
    %47 = math.erf %46 : vector<8x32xf32>
    %cst_24 = arith.constant 1.000000e+00 : f32
    %48 = vector.broadcast %cst_24 : f32 to vector<8x32xf32>
    %49 = arith.addf %48, %47 : vector<8x32xf32>
    %50 = arith.mulf %44, %49 : vector<8x32xf32>
    %c0_25 = arith.constant 0 : index
    %c0_26 = arith.constant 0 : index
    %51 = vector.load %arg6[%c0_25, %c0_26] : memref<32x32xf32, #tpu.memory_space<vmem>>, vector<32x32xf32>
    %cst_27 = arith.constant dense<0.000000e+00> : vector<8x32xf32>
    %52 = tpu.matmul %50, %51, %cst_27 {dimension_numbers = #tpu.dot_dimension_numbers<[1], [0], [0], [1], [0, 0, 1, 1], [], []>} : vector<8x32xf32>, vector<32x32xf32>, vector<8x32xf32> -> vector<8x32xf32>
    %c0_28 = arith.constant 0 : index
    %c0_29 = arith.constant 0 : index
    %53 = vector.load %arg7[%c0_28, %c0_29] : memref<1x32xf32, #tpu.memory_space<vmem>>, vector<1x32xf32>
    %54 = vector.broadcast %53 : vector<1x32xf32> to vector<8x32xf32>
    %55 = arith.addf %52, %54 : vector<8x32xf32>
    %56 = vector.extract_strided_slice %55 {offsets = [0, 0], sizes = [8, 16], strides = [1, 1]} : vector<8x32xf32> to vector<8x16xf32>
    %57 = vector.extract_strided_slice %55 {offsets = [0, 16], sizes = [8, 16], strides = [1, 1]} : vector<8x32xf32> to vector<8x16xf32>
    %c0_30 = arith.constant 0 : index
    %c0_31 = arith.constant 0 : index
    %58 = vector.load %arg1[%c0_30, %c0_31] : memref<8x16xf32, #tpu.memory_space<vmem>>, vector<8x16xf32>
    %cst_32 = arith.constant 5.000000e-01 : f32
    %59 = vector.broadcast %cst_32 : f32 to vector<8x16xf32>
    %60 = arith.mulf %59, %57 : vector<8x16xf32>
    %61 = math.exp %60 : vector<8x16xf32>
    %62 = arith.mulf %58, %61 : vector<8x16xf32>
    %63 = arith.addf %62, %56 : vector<8x16xf32>
    %c0_33 = arith.constant 0 : index
    %c0_34 = arith.constant 0 : index
    %64 = vector.load %arg12[%c0_33, %c0_34] : memref<16x8xf32, #tpu.memory_space<vmem>>, vector<16x8xf32>
    %cst_35 = arith.constant dense<0.000000e+00> : vector<8x8xf32>
    %65 = tpu.matmul %63, %64, %cst_35 {dimension_numbers = #tpu.dot_dimension_numbers<[1], [0], [0], [1], [0, 0, 1, 1], [], []>} : vector<8x16xf32>, vector<16x8xf32>, vector<8x8xf32> -> vector<8x8xf32>
    %c0_36 = arith.constant 0 : index
    %c0_37 = arith.constant 0 : index
    %66 = vector.load %arg13[%c0_36, %c0_37] : memref<1x8xf32, #tpu.memory_space<vmem>>, vector<1x8xf32>
    %67 = vector.broadcast %66 : vector<1x8xf32> to vector<8x8xf32>
    %68 = arith.addf %65, %67 : vector<8x8xf32>
    %cst_38 = arith.constant dense<0xFF800000> : vector<8xf32>
    %69 = vector.multi_reduction <maximumf>, %68, %cst_38 [1] : vector<8x8xf32> to vector<8xf32>
    %70 = vector.shape_cast %69 : vector<8xf32> to vector<8x1xf32>
    %71 = vector.broadcast %70 : vector<8x1xf32> to vector<8x8xf32>
    %72 = arith.subf %68, %71 : vector<8x8xf32>
    %73 = math.exp %72 : vector<8x8xf32>
    %cst_39 = arith.constant dense<0.000000e+00> : vector<8xf32>
    %74 = vector.multi_reduction <add>, %73, %cst_39 [1] : vector<8x8xf32> to vector<8xf32>
    %75 = vector.shape_cast %74 : vector<8xf32> to vector<8x1xf32>
    %76 = math.log %75 : vector<8x1xf32>
    %77 = vector.broadcast %76 : vector<8x1xf32> to vector<8x8xf32>
    %78 = arith.subf %72, %77 : vector<8x8xf32>
    %c0_40 = arith.constant 0 : index
    %c0_41 = arith.constant 0 : index
    %79 = vector.load %arg8[%c0_40, %c0_41] : memref<16x200xf32, #tpu.memory_space<vmem>>, vector<16x200xf32>
    %cst_42 = arith.constant dense<0.000000e+00> : vector<8x200xf32>
    %80 = tpu.matmul %63, %79, %cst_42 {dimension_numbers = #tpu.dot_dimension_numbers<[1], [0], [0], [1], [0, 0, 1, 1], [], []>} : vector<8x16xf32>, vector<16x200xf32>, vector<8x200xf32> -> vector<8x200xf32>
    %c0_43 = arith.constant 0 : index
    %c0_44 = arith.constant 0 : index
    %81 = vector.load %arg9[%c0_43, %c0_44] : memref<1x200xf32, #tpu.memory_space<vmem>>, vector<1x200xf32>
    %82 = vector.broadcast %81 : vector<1x200xf32> to vector<8x200xf32>
    %83 = arith.addf %80, %82 : vector<8x200xf32>
    %cst_45 = arith.constant 5.000000e-01 : f32
    %84 = vector.broadcast %cst_45 : f32 to vector<8x200xf32>
    %85 = arith.mulf %84, %83 : vector<8x200xf32>
    %cst_46 = arith.constant 0.707106769 : f32
    %86 = vector.broadcast %cst_46 : f32 to vector<8x200xf32>
    %87 = arith.mulf %83, %86 : vector<8x200xf32>
    %88 = math.erf %87 : vector<8x200xf32>
    %cst_47 = arith.constant 1.000000e+00 : f32
    %89 = vector.broadcast %cst_47 : f32 to vector<8x200xf32>
    %90 = arith.addf %89, %88 : vector<8x200xf32>
    %91 = arith.mulf %85, %90 : vector<8x200xf32>
    %c0_48 = arith.constant 0 : index
    %c0_49 = arith.constant 0 : index
    %92 = vector.load %arg10[%c0_48, %c0_49] : memref<200x64xf32, #tpu.memory_space<vmem>>, vector<200x64xf32>
    %cst_50 = arith.constant dense<0.000000e+00> : vector<8x64xf32>
    %93 = tpu.matmul %91, %92, %cst_50 {dimension_numbers = #tpu.dot_dimension_numbers<[1], [0], [0], [1], [0, 0, 1, 1], [], []>} : vector<8x200xf32>, vector<200x64xf32>, vector<8x64xf32> -> vector<8x64xf32>
    %c0_51 = arith.constant 0 : index
    %c0_52 = arith.constant 0 : index
    %94 = vector.load %arg11[%c0_51, %c0_52] : memref<1x64xf32, #tpu.memory_space<vmem>>, vector<1x64xf32>
    %95 = vector.broadcast %94 : vector<1x64xf32> to vector<8x64xf32>
    %96 = arith.addf %93, %95 : vector<8x64xf32>
    %97 = arith.negf %96 : vector<8x64xf32>
    %98 = math.exp %97 : vector<8x64xf32>
    %cst_53 = arith.constant 1.000000e+00 : f32
    %99 = vector.broadcast %cst_53 : f32 to vector<8x64xf32>
    %100 = arith.addf %99, %98 : vector<8x64xf32>
    %101 = arith.divf %99, %100 : vector<8x64xf32>
    %cst_54 = arith.constant 0.000000e+00 : f32
    %102 = vector.broadcast %cst_54 : f32 to vector<8x8xf32>
    %103 = tpu.concatenate %101, %56, %57, %63, %78, %102 in 1 : vector<8x64xf32>, vector<8x16xf32>, vector<8x16xf32>, vector<8x16xf32>, vector<8x8xf32>, vector<8x8xf32> -> vector<8x128xf32>
    %c0_55 = arith.constant 0 : index
    %c0_56 = arith.constant 0 : index
    %104 = vector.load %arg16[%c0_55, %c0_56] : memref<8x128xf32, #tpu.memory_space<vmem>>, vector<8x128xf32>
    tpu.vector_store %arg16[%c0_55, %c0_56], %103 {strides = array<i32>} : memref<8x128xf32, #tpu.memory_space<vmem>>, vector<8x128xf32>,
    return
  }
}

</mosaic_0001>

<llo_original>
// kernel: _vae_forward_impl.3
$region0: #{_vae_forward_impl.3}
  #allocation0 [shape = 'u32[]', space=smem, size = 0x4, offset = 0x4, fixed_abs, tag = 'smem constant byte address 0x4 - core index']
  #allocation1 [shape = 'u32[72,128]{1,0:T(1,128)}', space=vmem, size = 0x9000, scoped, tag = 'internal scratch']
  %s0 = inlined_call_operand.vmem [shape: f32[8,16], index: 0, kind: input, shape index: {}, may-alias: {0,1}]
  %s1 = inlined_call_operand.vmem [shape: f32[8,16], index: 1, kind: input, shape index: {}, may-alias: {0,1}]
  %s2 = inlined_call_operand.hbm [shape: f32[8,8], index: 2, kind: output, shape index: {}]
  %s3 = sld [smem:[#allocation0]]
  $region18: #{_vae_forward_impl.3} parent=0
    _
  %s5 = ssub.s32 1, %s3
  %s6 = scalar_select 0, %s5, %s3
  $region1: #{_vae_forward_impl.3} parent=0
    #allocation2 [shape = 'u8[4096]{0}', space=vmem, size = 0x1000, scoped, tag = 'output window, operand 0, single buffered']
    #allocation3 [shape = 's32[1]{0}', space=sflag, size = 0x4, scoped, tag = 'scoped memory for _vae_forward_impl.3']
    %7 = vsyncpa [#allocation3], 0
    // Predicated region
    $region2: #{_vae_forward_impl.3} parent=1 // pred_check
      _
    $region3: #{_vae_forward_impl.3} parent=1 // pred_check_branch
      %9 = sbr.rel (0) target = $region5
    $region4: #{_vae_forward_impl.3} parent=1 // pred_region
      _
    $region5: #{_vae_forward_impl.3} parent=1 // pred_fallthru
      _
    // Predicated region
    $region6: #{_vae_forward_impl.3} parent=1 // pred_check
      _
    $region7: #{_vae_forward_impl.3} parent=1 // pred_check_branch
      %11 = sbr.rel (0) target = $region9
    $region8: #{_vae_forward_impl.3} parent=1 // pred_region
      _
    $region9: #{_vae_forward_impl.3} parent=1 // pred_fallthru
      _
    %v12 = vld [vmem:[%s0] sm:$0xff]
    %v13 = vld [vmem:[%s1] sm:$0xff]
    %v14 = vmul.f32 %v12, %v12
    %vm15 = vcmask 130048
    %v16 = vsel %vm15, %v14, 0.0
    %17 = vadd.xlane.f32.xlu0 %v16
    %v18 = vpop.xlane.xlu0 %17
    %v19 = vrsqrt.pop %v18
    %v20 = vmul.f32 %v19, %v18
    %v21 = vmul.f32 %v20, %v19
    %v22 = vmul.f32 0.5, %v21
    %v23 = vsub.f32 1.5, %v22
    %v24 = vmul.f32 %v19, %v23
    %vm25 = vweird.f32 %v18
    %vm26 = vweird.f32 %v19
    %vm27 = vmor %vm25, %vm26
    %v28 = vsel %vm27, %v19, %v24
    %v29 = vmul.f32 %v12, %v28
    %v30 = vmul.f32 %v13, %v13
    %v31 = vsel %vm15, %v30, 0.0
    %32 = vadd.xlane.f32.xlu0 %v31
    %v33 = vpop.xlane.xlu0 %32
    %v34 = vrsqrt.pop %v33
    %v35 = vmul.f32 %v34, %v33
    %v36 = vmul.f32 %v35, %v34
    %v37 = vmul.f32 0.5, %v36
    %v38 = vsub.f32 1.5, %v37
    %v39 = vmul.f32 %v34, %v38
    %vm40 = vweird.f32 %v33
    %vm41 = vweird.f32 %v34
    %vm42 = vmor %vm40, %vm41
    %v43 = vsel %vm42, %v34, %v39
    %v44 = vmul.f32 %v13, %v43
    %v46 = vsel %vm15, %v29, 0
    %v49 = vsel %vm15, %v44, 0
    %51 = vmatpush.xpose.msra.mxu0 0.0
    %52 = vmatpush.xpose.msra.mxu0 0.0
    %53 = vmatpush.xpose.msra.mxu0 0.0
    %54 = vmatpush.xpose.msra.mxu0 0.0
    %55 = vmatpush.xpose.msra.mxu0 0.0
    %56 = vmatpush.xpose.msra.mxu0 0.0
    %57 = vmatpush.xpose.msra.mxu0 0.0
    %58 = vmatpush.xpose.msra.mxu0 0.0
    %59 = vmatpush.xpose.msra.mxu0 0.0
    %60 = vmatpush.xpose.msra.mxu0 0.0
    %61 = vmatpush.xpose.msra.mxu0 0.0
    %62 = vmatpush.xpose.msra.mxu0 0.0
    %63 = vmatpush.xpose.msra.mxu0 0.0
    %64 = vmatpush.xpose.msra.mxu0 0.0
    %65 = vmatpush.xpose.msra.mxu0 0.0
    %66 = vmatpush.xpose.msra.mxu0 %v49
    %67 = vmatmul.f32.gmra.mxu0 %v46
    %v68 = vpop.f32.mrf.mxu0
    %v69 = vadd.f32 0.0, %v68
    %70 = vdwg.mxu0
    %v71 = vlaneseq
    %v72 = vshrl.u32 %v71, 7
    %s73 = smul.u32 0, 8
    %v74 = vstv %s73
    %v75 = vadd.s32 %v72, %v74
    %v76 = vlaneseq
    %v77 = vand.u32 %v76, 127
    %s78 = smul.u32 0, 8
    %v79 = vstv %s78
    %v80 = vadd.s32 %v77, %v79
    %vm81 = vcmp.eq.s32.totalorder %v75, %v80
    %v82 = vsel %vm81, 0.0, %v69
    %vm83 = vcmask 64512
    %84 = vst.msk [vmem:[#allocation2] sm:$0xff] %vm83, %v82
    // Predicated region
    $region10: #{_vae_forward_impl.3} parent=1 // pred_check
      _
    $region11: #{_vae_forward_impl.3} parent=1 // pred_check_branch
      %86 = sbr.rel (0) target = $region13
    $region12: #{_vae_forward_impl.3} parent=1 // pred_region
      %88 = vsyncadd [#allocation3], 0
      %s90 = sshll.u32 [#allocation2], 4
      %s91 = int_to_ptr.vmem [resolvable:$true] %s90
      %s92 = sshll.u32 %s2, 4
      %s93 = int_to_ptr.hbm [resolvable:$true] %s92
      %95 = dma.vmem_to_hbm [thread:$0]  %s91, 128, %s93, [#allocation3]
    $region13: #{_vae_forward_impl.3} parent=1 // pred_fallthru
      _
    // Predicated region
    $region14: #{_vae_forward_impl.3} parent=1 // pred_check
      _
    $region15: #{_vae_forward_impl.3} parent=1 // pred_check_branch
      %97 = sbr.rel (0) target = $region17
    $region16: #{_vae_forward_impl.3} parent=1 // pred_region
      %99 = dma.done [#allocation3], 128
    $region17: #{_vae_forward_impl.3} parent=1 // pred_fallthru
      _
    %100 = vsyncpa [#allocation3], 1

// kernel: _vae_forward_impl.2
$region0: #{_vae_forward_impl.2}
  #allocation0 [shape = 'u32[]', space=smem, size = 0x4, offset = 0x4, fixed_abs, tag = 'smem constant byte address 0x4 - core index']
  #allocation1 [shape = 'u32[72,128]{1,0:T(1,128)}', space=vmem, size = 0x9000, scoped, tag = 'internal scratch']
  %s0 = inlined_call_operand.vmem [shape: f32[8,64], index: 0, kind: input, shape index: {}]
  %s1 = inlined_call_operand.vmem [shape: f32[8,16], index: 1, kind: input, shape index: {}]
  %s2 = inlined_call_operand.vmem [shape: f32[64,200], index: 2, kind: input, shape index: {}]
  %s3 = inlined_call_operand.vmem [shape: f32[1,200], index: 3, kind: input, shape index: {}]
  %s4 = inlined_call_operand.vmem [shape: f32[200,32], index: 4, kind: input, shape index: {}]
  %s5 = inlined_call_operand.vmem [shape: f32[1,32], index: 5, kind: input, shape index: {}]
  %s6 = inlined_call_operand.vmem [shape: f32[32,32], index: 6, kind: input, shape index: {}]
  %s7 = inlined_call_operand.vmem [shape: f32[1,32], index: 7, kind: input, shape index: {}]
  %s8 = inlined_call_operand.vmem [shape: f32[16,200], index: 8, kind: input, shape index: {}]
  %s9 = inlined_call_operand.vmem [shape: f32[1,200], index: 9, kind: input, shape index: {}]
  %s10 = inlined_call_operand.vmem [shape: f32[200,64], index: 10, kind: input, shape index: {}]
  %s11 = inlined_call_operand.vmem [shape: f32[1,64], index: 11, kind: input, shape index: {}]
  %s12 = inlined_call_operand.vmem [shape: f32[16,8], index: 12, kind: input, shape index: {}]
  %s13 = inlined_call_operand.vmem [shape: f32[1,8], index: 13, kind: input, shape index: {}]
  %s14 = inlined_call_operand.vmem [shape: f32[1,200], index: 14, kind: input, shape index: {}]
  %s15 = inlined_call_operand.vmem [shape: f32[1,200], index: 15, kind: input, shape index: {}]
  %s16 = inlined_call_operand.vmem [shape: f32[8,128], index: 16, kind: output, shape index: {}]
  %s17 = sld [smem:[#allocation0]]
  $region74: #{_vae_forward_impl.2} parent=0
    _
  %s19 = ssub.s32 1, %s17
  %s20 = scalar_select 0, %s19, %s17
  // Predicated region
  $region2: #{_vae_forward_impl.2} parent=0 // pred_check
    _
  $region3: #{_vae_forward_impl.2} parent=0 // pred_check_branch
    %22 = sbr.rel (0) target = $region5
  $region4: #{_vae_forward_impl.2} parent=0 // pred_region
    _
  $region5: #{_vae_forward_impl.2} parent=0 // pred_fallthru
    _
  // Predicated region
  $region6: #{_vae_forward_impl.2} parent=0 // pred_check
    _
  $region7: #{_vae_forward_impl.2} parent=0 // pred_check_branch
    %24 = sbr.rel (0) target = $region9
  $region8: #{_vae_forward_impl.2} parent=0 // pred_region
    _
  $region9: #{_vae_forward_impl.2} parent=0 // pred_fallthru
    _
  // Predicated region
  $region10: #{_vae_forward_impl.2} parent=0 // pred_check
    _
  $region11: #{_vae_forward_impl.2} parent=0 // pred_check_branch
    %26 = sbr.rel (0) target = $region13
  $region12: #{_vae_forward_impl.2} parent=0 // pred_region
    _
  $region13: #{_vae_forward_impl.2} parent=0 // pred_fallthru
    _
  // Predicated region
  $region14: #{_vae_forward_impl.2} parent=0 // pred_check
    _
  $region15: #{_vae_forward_impl.2} parent=0 // pred_check_branch
    %28 = sbr.rel (0) target = $region17
  $region16: #{_vae_forward_impl.2} parent=0 // pred_region
    _
  $region17: #{_vae_forward_impl.2} parent=0 // pred_fallthru
    _
  // Predicated region
  $region18: #{_vae_forward_impl.2} parent=0 // pred_check
    _
  $region19: #{_vae_forward_impl.2} parent=0 // pred_check_branch
    %30 = sbr.rel (0) target = $region21
  $region20: #{_vae_forward_impl.2} parent=0 // pred_region
    _
  $region21: #{_vae_forward_impl.2} parent=0 // pred_fallthru
    _
  // Predicated region
  $region22: #{_vae_forward_impl.2} parent=0 // pred_check
    _
  $region23: #{_vae_forward_impl.2} parent=0 // pred_check_branch
    %32 = sbr.rel (0) target = $region25
  $region24: #{_vae_forward_impl.2} parent=0 // pred_region
    _
  $region25: #{_vae_forward_impl.2} parent=0 // pred_fallthru
    _
  // Predicated region
  $region26: #{_vae_forward_impl.2} parent=0 // pred_check
    _
  $region27: #{_vae_forward_impl.2} parent=0 // pred_check_branch
    %34 = sbr.rel (0) target = $region29
  $region28: #{_vae_forward_impl.2} parent=0 // pred_region
    _
  $region29: #{_vae_forward_impl.2} parent=0 // pred_fallthru
    _
  // Predicated region
  $region30: #{_vae_forward_impl.2} parent=0 // pred_check
    _
  $region31: #{_vae_forward_impl.2} parent=0 // pred_check_branch
    %36 = sbr.rel (0) target = $region33
  $region32: #{_vae_forward_impl.2} parent=0 // pred_region
    _
  $region33: #{_vae_forward_impl.2} parent=0 // pred_fallthru
    _
  // Predicated region
  $region34: #{_vae_forward_impl.2} parent=0 // pred_check
    _
  $region35: #{_vae_forward_impl.2} parent=0 // pred_check_branch
    %38 = sbr.rel (0) target = $region37
  $region36: #{_vae_forward_impl.2} parent=0 // pred_region
    _
  $region37: #{_vae_forward_impl.2} parent=0 // pred_fallthru
    _
  // Predicated region
  $region38: #{_vae_forward_impl.2} parent=0 // pred_check
    _
  $region39: #{_vae_forward_impl.2} parent=0 // pred_check_branch
    %40 = sbr.rel (0) target = $region41
  $region40: #{_vae_forward_impl.2} parent=0 // pred_region
    _
  $region41: #{_vae_forward_impl.2} parent=0 // pred_fallthru
    _
  // Predicated region
  $region42: #{_vae_forward_impl.2} parent=0 // pred_check
    _
  $region43: #{_vae_forward_impl.2} parent=0 // pred_check_branch
    %42 = sbr.rel (0) target = $region45
  $region44: #{_vae_forward_impl.2} parent=0 // pred_region
    _
  $region45: #{_vae_forward_impl.2} parent=0 // pred_fallthru
    _
  // Predicated region
  $region46: #{_vae_forward_impl.2} parent=0 // pred_check
    _
  $region47: #{_vae_forward_impl.2} parent=0 // pred_check_branch
    %44 = sbr.rel (0) target = $region49
  $region48: #{_vae_forward_impl.2} parent=0 // pred_region
    _
  $region49: #{_vae_forward_impl.2} parent=0 // pred_fallthru
    _
  // Predicated region
  $region50: #{_vae_forward_impl.2} parent=0 // pred_check
    _
  $region51: #{_vae_forward_impl.2} parent=0 // pred_check_branch
    %46 = sbr.rel (0) target = $region53
  $region52: #{_vae_forward_impl.2} parent=0 // pred_region
    _
  $region53: #{_vae_forward_impl.2} parent=0 // pred_fallthru
    _
  // Predicated region
  $region54: #{_vae_forward_impl.2} parent=0 // pred_check
    _
  $region55: #{_vae_forward_impl.2} parent=0 // pred_check_branch
    %48 = sbr.rel (0) target = $region57
  $region56: #{_vae_forward_impl.2} parent=0 // pred_region
    _
  $region57: #{_vae_forward_impl.2} parent=0 // pred_fallthru
    _
  // Predicated region
  $region58: #{_vae_forward_impl.2} parent=0 // pred_check
    _
  $region59: #{_vae_forward_impl.2} parent=0 // pred_check_branch
    %50 = sbr.rel (0) target = $region61
  $region60: #{_vae_forward_impl.2} parent=0 // pred_region
    _
  $region61: #{_vae_forward_impl.2} parent=0 // pred_fallthru
    _
  // Predicated region
  $region62: #{_vae_forward_impl.2} parent=0 // pred_check
    _
  $region63: #{_vae_forward_impl.2} parent=0 // pred_check_branch
    %52 = sbr.rel (0) target = $region65
  $region64: #{_vae_forward_impl.2} parent=0 // pred_region
    _
  $region65: #{_vae_forward_impl.2} parent=0 // pred_fallthru
    _
  %v53 = vld [vmem:[%s0] sm:$0xff]
  %v54 = vld [vmem:[%s2] sm:$0xff]
  %v55 = vld [vmem:[%s2 + $0x8] sm:$0xff]
  %v56 = vld [vmem:[%s2 + $0x10] sm:$0xff]
  %v57 = vld [vmem:[%s2 + $0x18] sm:$0xff]
  %v58 = vld [vmem:[%s2 + $0x20] sm:$0xff]
  %v59 = vld [vmem:[%s2 + $0x28] sm:$0xff]
  %v60 = vld [vmem:[%s2 + $0x30] sm:$0xff]
  %v61 = vld [vmem:[%s2 + $0x38] sm:$0xff]
  %v62 = vld [vmem:[%s2 + $0x40] sm:$0xff]
  %v63 = vld [vmem:[%s2 + $0x48] sm:$0xff]
  %v64 = vld [vmem:[%s2 + $0x50] sm:$0xff]
  %v65 = vld [vmem:[%s2 + $0x58] sm:$0xff]
  %v66 = vld [vmem:[%s2 + $0x60] sm:$0xff]
  %v67 = vld [vmem:[%s2 + $0x68] sm:$0xff]
  %v68 = vld [vmem:[%s2 + $0x70] sm:$0xff]
  %v69 = vld [vmem:[%s2 + $0x78] sm:$0xff]
  %v70 = vld [vmem:[%s3] sm:$0x3]
  %v72 = vperm.slane %v70, 0
  %v73 = vperm.slane %v70, 1
  %vm76 = vcmask 523264
  %v78 = vsel %vm76, %v53, 0
  %80 = vmatpush.msra.mxu0 0.0
  %81 = vmatpush.msra.mxu0 0.0
  %82 = vmatpush.msra.mxu0 0.0
  %83 = vmatpush.msra.mxu0 0.0
  %84 = vmatpush.msra.mxu0 0.0
  %85 = vmatpush.msra.mxu0 0.0
  %86 = vmatpush.msra.mxu0 0.0
  %87 = vmatpush.msra.mxu0 0.0
  %88 = vmatpush.msra.mxu0 %v68
  %89 = vmatpush.msra.mxu0 %v66
  %90 = vmatpush.msra.mxu0 %v64
  %91 = vmatpush.msra.mxu0 %v62
  %92 = vmatpush.msra.mxu0 %v60
  %93 = vmatpush.msra.mxu0 %v58
  %94 = vmatpush.msra.mxu0 %v56
  %95 = vmatpush.msra.mxu0 %v54
  %96 = vmatmul.f32.gmra.mxu0 %v78
  %v97 = vpop.f32.mrf.mxu0
  %v98 = vadd.f32 %v72, %v97
  %99 = vdwg.mxu0
  %100 = vmatpush.msra.mxu0 0.0
  %101 = vmatpush.msra.mxu0 0.0
  %102 = vmatpush.msra.mxu0 0.0
  %103 = vmatpush.msra.mxu0 0.0
  %104 = vmatpush.msra.mxu0 0.0
  %105 = vmatpush.msra.mxu0 0.0
  %106 = vmatpush.msra.mxu0 0.0
  %107 = vmatpush.msra.mxu0 0.0
  %108 = vmatpush.msra.mxu0 %v69
  %109 = vmatpush.msra.mxu0 %v67
  %110 = vmatpush.msra.mxu0 %v65
  %111 = vmatpush.msra.mxu0 %v63
  %112 = vmatpush.msra.mxu0 %v61
  %113 = vmatpush.msra.mxu0 %v59
  %114 = vmatpush.msra.mxu0 %v57
  %115 = vmatpush.msra.mxu0 %v55
  %116 = vmatmul.f32.gmra.mxu0 %v78
  %v117 = vpop.f32.mrf.mxu0
  %v118 = vadd.f32 %v73, %v117
  %119 = vdwg.mxu0
  %v120 = vmul.f32 %v98, 0.5
  %v121 = vmul.f32 %v118, 0.5
  %v122 = vmul.f32 %v98, 0.70710677
  %v123 = vmul.f32 %v118, 0.70710677
  %v124 = vmul.f32 %v122, %v122
  %v125 = vmin.f32 16.0, %v124
  %v126 = vmul.f32 %v125, 2.1237322e-06
  %v127 = vadd.f32 %v126, 0.00028619796
  %v128 = vmul.f32 %v125, %v127
  %v129 = vadd.f32 %v128, 0.0036580483
  %v130 = vmul.f32 %v125, %v129
  %v131 = vadd.f32 %v130, 0.05243302
  %v132 = vmul.f32 %v125, %v131
  %v133 = vadd.f32 %v132, 0.18741608
  %v134 = vmul.f32 %v125, %v133
  %v135 = vadd.f32 %v134, 1.1283791
  %v136 = vmul.f32 %v122, %v135
  %v137 = vmul.f32 %v125, 3.8918573e-05
  %v138 = vadd.f32 %v137, 0.001143296
  %v139 = vmul.f32 %v125, %v138
  %v140 = vadd.f32 %v139, 0.014752088
  %v141 = vmul.f32 %v125, %v140
  %v142 = vadd.f32 %v141, 0.112945676
  %v143 = vmul.f32 %v125, %v142
  %v144 = vadd.f32 %v143, 0.4994258
  %v145 = vmul.f32 %v125, %v144
  %v146 = vadd.f32 %v145, 1.0
  %v147 = vrcp.pop %v146
  %v148 = vmul.f32 %v146, %v147
  %v149 = vsub.f32 1.0, %v148
  %v150 = vmul.f32 %v147, %v149
  %v151 = vadd.f32 %v147, %v150
  %vm152 = vweird.f32 %v146
  %vm153 = vweird.f32 %v147
  %vm154 = vmor %vm152, %vm153
  %v155 = vsel %vm154, %v147, %v151
  %v156 = vand.u32 2147483647, %v146
  %vm157 = vcmp.eq.f32.partialorder %v156, 8.507059e+37
  %v158 = vand.u32 %v146, 2147483648
  %v159 = vor.u32 1.1754944e-38, %v158
  %v160 = vsel %vm157, %v159, %v155
  %v161 = vmul.f32 %v136, %v160
  %v162 = vmin.f32 %v161, 1.0
  %v163 = vmax.f32 %v162, -1.0
  %v164 = vmul.f32 %v123, %v123
  %v165 = vmin.f32 16.0, %v164
  %v166 = vmul.f32 %v165, 2.1237322e-06
  %v167 = vadd.f32 %v166, 0.00028619796
  %v168 = vmul.f32 %v165, %v167
  %v169 = vadd.f32 %v168, 0.0036580483
  %v170 = vmul.f32 %v165, %v169
  %v171 = vadd.f32 %v170, 0.05243302
  %v172 = vmul.f32 %v165, %v171
  %v173 = vadd.f32 %v172, 0.18741608
  %v174 = vmul.f32 %v165, %v173
  %v175 = vadd.f32 %v174, 1.1283791
  %v176 = vmul.f32 %v123, %v175
  %v177 = vmul.f32 %v165, 3.8918573e-05
  %v178 = vadd.f32 %v177, 0.001143296
  %v179 = vmul.f32 %v165, %v178
  %v180 = vadd.f32 %v179, 0.014752088
  %v181 = vmul.f32 %v165, %v180
  %v182 = vadd.f32 %v181, 0.112945676
  %v183 = vmul.f32 %v165, %v182
  %v184 = vadd.f32 %v183, 0.4994258
  %v185 = vmul.f32 %v165, %v184
  %v186 = vadd.f32 %v185, 1.0
  %v187 = vrcp.pop %v186
  %v188 = vmul.f32 %v186, %v187
  %v189 = vsub.f32 1.0, %v188
  %v190 = vmul.f32 %v187, %v189
  %v191 = vadd.f32 %v187, %v190
  %vm192 = vweird.f32 %v186
  %vm193 = vweird.f32 %v187
  %vm194 = vmor %vm192, %vm193
  %v195 = vsel %vm194, %v187, %v191
  %v196 = vand.u32 2147483647, %v186
  %vm197 = vcmp.eq.f32.partialorder %v196, 8.507059e+37
  %v198 = vand.u32 %v186, 2147483648
  %v199 = vor.u32 1.1754944e-38, %v198
  %v200 = vsel %vm197, %v199, %v195
  %v201 = vmul.f32 %v176, %v200
  %v202 = vmin.f32 %v201, 1.0
  %v203 = vmax.f32 %v202, -1.0
  %v204 = vadd.f32 %v163, 1.0
  %v205 = vadd.f32 %v203, 1.0
  %v206 = vmul.f32 %v120, %v204
  %v207 = vmul.f32 %v121, %v205
  %vm208 = vcmask 588800
  %v209 = vsel %vm208, %v207, 0.0
  %v210 = vadd.f32 %v206, %v209
  %211 = vadd.xlane.f32.xlu0 %v210
  %v212 = vpop.xlane.xlu0 %211
  %v213 = vrcp.pop 200.0
  %v214 = vmul.f32 200.0, %v213
  %v215 = vsub.f32 1.0, %v214
  %v216 = vmul.f32 %v213, %v215
  %v217 = vadd.f32 %v213, %v216
  %vm218 = vweird.f32 %v213
  %v219 = vsel %vm218, %v213, %v217
  %v220 = vmul.f32 %v212, %v219
  %v221 = vsub.f32 %v206, %v220
  %v222 = vsub.f32 %v207, %v220
  %v223 = vmul.f32 %v221, %v221
  %v224 = vmul.f32 %v222, %v222
  %v225 = vsel %vm208, %v224, 0.0
  %v226 = vadd.f32 %v223, %v225
  %227 = vadd.xlane.f32.xlu0 %v226
  %v228 = vpop.xlane.xlu0 %227
  %v229 = vmul.f32 %v228, %v219
  %v230 = vadd.f32 %v229, 1e-06
  %v231 = vrsqrt.pop %v230
  %v232 = vmul.f32 %v231, %v230
  %v233 = vmul.f32 %v232, %v231
  %v234 = vmul.f32 0.5, %v233
  %v235 = vsub.f32 1.5, %v234
  %v236 = vmul.f32 %v231, %v235
  %vm237 = vweird.f32 %v230
  %vm238 = vweird.f32 %v231
  %vm239 = vmor %vm237, %vm238
  %v240 = vsel %vm239, %v231, %v236
  %v241 = vmul.f32 %v221, %v240
  %v242 = vmul.f32 %v222, %v240
  %v243 = vld [vmem:[%s14] sm:$0x3]
  %v245 = vperm.slane %v243, 0
  %v246 = vperm.slane %v243, 1
  %v249 = vmul.f32 %v241, %v245
  %v250 = vmul.f32 %v242, %v246
  %v251 = vld [vmem:[%s15] sm:$0x3]
  %v253 = vperm.slane %v251, 0
  %v254 = vperm.slane %v251, 1
  %v257 = vadd.f32 %v249, %v253
  %v258 = vadd.f32 %v250, %v254
  %v259 = vld [vmem:[%s4] sm:$0xff]
  %v260 = vld [vmem:[%s4 + $0x8] sm:$0xff]
  %v261 = vld [vmem:[%s4 + $0x10] sm:$0xff]
  %v262 = vld [vmem:[%s4 + $0x18] sm:$0xff]
  %v263 = vld [vmem:[%s4 + $0x20] sm:$0xff]
  %v264 = vld [vmem:[%s4 + $0x28] sm:$0xff]
  %v265 = vld [vmem:[%s4 + $0x30] sm:$0xff]
  %v266 = vld [vmem:[%s4 + $0x38] sm:$0xff]
  %v267 = vld [vmem:[%s4 + $0x40] sm:$0xff]
  %v268 = vld [vmem:[%s4 + $0x48] sm:$0xff]
  %v269 = vld [vmem:[%s4 + $0x50] sm:$0xff]
  %v270 = vld [vmem:[%s4 + $0x58] sm:$0xff]
  %v271 = vld [vmem:[%s4 + $0x60] sm:$0xff]
  %v272 = vld [vmem:[%s4 + $0x68] sm:$0xff]
  %v273 = vld [vmem:[%s4 + $0x70] sm:$0xff]
  %v274 = vld [vmem:[%s4 + $0x78] sm:$0xff]
  %v275 = vld [vmem:[%s4 + $0x80] sm:$0xff]
  %v276 = vld [vmem:[%s4 + $0x88] sm:$0xff]
  %v277 = vld [vmem:[%s4 + $0x90] sm:$0xff]
  %v278 = vld [vmem:[%s4 + $0x98] sm:$0xff]
  %v279 = vld [vmem:[%s4 + $0xa0] sm:$0xff]
  %v280 = vld [vmem:[%s4 + $0xa8] sm:$0xff]
  %v281 = vld [vmem:[%s4 + $0xb0] sm:$0xff]
  %v282 = vld [vmem:[%s4 + $0xb8] sm:$0xff]
  %v283 = vld [vmem:[%s4 + $0xc0] sm:$0xff]
  %v284 = vld [vmem:[%s5] sm:$0x1]
  %v286 = vperm.slane %v284, 0
  %v289 = vsel %vm208, %v258, 0
  %291 = vmatpush.msra.mxu0 %v274
  %292 = vmatpush.msra.mxu0 %v273
  %293 = vmatpush.msra.mxu0 %v272
  %294 = vmatpush.msra.mxu0 %v271
  %295 = vmatpush.msra.mxu0 %v270
  %296 = vmatpush.msra.mxu0 %v269
  %297 = vmatpush.msra.mxu0 %v268
  %298 = vmatpush.msra.mxu0 %v267
  %299 = vmatpush.msra.mxu0 %v266
  %300 = vmatpush.msra.mxu0 %v265
  %301 = vmatpush.msra.mxu0 %v264
  %302 = vmatpush.msra.mxu0 %v263
  %303 = vmatpush.msra.mxu0 %v262
  %304 = vmatpush.msra.mxu0 %v261
  %305 = vmatpush.msra.mxu0 %v260
  %306 = vmatpush.msra.mxu0 %v259
  %307 = vmatmul.f32.gmra.mxu0 %v257
  %v308 = vpop.f32.mrf.mxu0
  %v309 = vadd.f32 %v286, %v308
  %310 = vdwg.mxu0
  %311 = vmatpush.msra.mxu0 0.0
  %312 = vmatpush.msra.mxu0 0.0
  %313 = vmatpush.msra.mxu0 0.0
  %314 = vmatpush.msra.mxu0 0.0
  %315 = vmatpush.msra.mxu0 0.0
  %316 = vmatpush.msra.mxu0 0.0
  %317 = vmatpush.msra.mxu0 0.0
  %318 = vmatpush.msra.mxu0 %v283
  %319 = vmatpush.msra.mxu0 %v282
  %320 = vmatpush.msra.mxu0 %v281
  %321 = vmatpush.msra.mxu0 %v280
  %322 = vmatpush.msra.mxu0 %v279
  %323 = vmatpush.msra.mxu0 %v278
  %324 = vmatpush.msra.mxu0 %v277
  %325 = vmatpush.msra.mxu0 %v276
  %326 = vmatpush.msra.mxu0 %v275
  %327 = vmatmul.f32.gmra.mxu0 %v289
  %v328 = vpop.f32.mrf.mxu0
  %v329 = vadd.f32 %v309, %v328
  %330 = vdwg.mxu0
  %v331 = vmul.f32 %v329, 0.5
  %v332 = vmul.f32 %v329, 0.70710677
  %v333 = vmul.f32 %v332, %v332
  %v334 = vmin.f32 16.0, %v333
  %v335 = vmul.f32 %v334, 2.1237322e-06
  %v336 = vadd.f32 %v335, 0.00028619796
  %v337 = vmul.f32 %v334, %v336
  %v338 = vadd.f32 %v337, 0.0036580483
  %v339 = vmul.f32 %v334, %v338
  %v340 = vadd.f32 %v339, 0.05243302
  %v341 = vmul.f32 %v334, %v340
  %v342 = vadd.f32 %v341, 0.18741608
  %v343 = vmul.f32 %v334, %v342
  %v344 = vadd.f32 %v343, 1.1283791
  %v345 = vmul.f32 %v332, %v344
  %v346 = vmul.f32 %v334, 3.8918573e-05
  %v347 = vadd.f32 %v346, 0.001143296
  %v348 = vmul.f32 %v334, %v347
  %v349 = vadd.f32 %v348, 0.014752088
  %v350 = vmul.f32 %v334, %v349
  %v351 = vadd.f32 %v350, 0.112945676
  %v352 = vmul.f32 %v334, %v351
  %v353 = vadd.f32 %v352, 0.4994258
  %v354 = vmul.f32 %v334, %v353
  %v355 = vadd.f32 %v354, 1.0
  %v356 = vrcp.pop %v355
  %v357 = vmul.f32 %v355, %v356
  %v358 = vsub.f32 1.0, %v357
  %v359 = vmul.f32 %v356, %v358
  %v360 = vadd.f32 %v356, %v359
  %vm361 = vweird.f32 %v355
  %vm362 = vweird.f32 %v356
  %vm363 = vmor %vm361, %vm362
  %v364 = vsel %vm363, %v356, %v360
  %v365 = vand.u32 2147483647, %v355
  %vm366 = vcmp.eq.f32.partialorder %v365, 8.507059e+37
  %v367 = vand.u32 %v355, 2147483648
  %v368 = vor.u32 1.1754944e-38, %v367
  %v369 = vsel %vm366, %v368, %v364
  %v370 = vmul.f32 %v345, %v369
  %v371 = vmin.f32 %v370, 1.0
  %v372 = vmax.f32 %v371, -1.0
  %v373 = vadd.f32 %v372, 1.0
  %v374 = vmul.f32 %v331, %v373
  %v375 = vld [vmem:[%s6] sm:$0xff]
  %v376 = vld [vmem:[%s6 + $0x8] sm:$0xff]
  %v377 = vld [vmem:[%s6 + $0x10] sm:$0xff]
  %v378 = vld [vmem:[%s6 + $0x18] sm:$0xff]
  %v379 = vld [vmem:[%s7] sm:$0x1]
  %v381 = vperm.slane %v379, 0
  %vm383 = vcmask 261120
  %v385 = vsel %vm383, %v374, 0
  %387 = vmatpush.msra.mxu0 0.0
  %388 = vmatpush.msra.mxu0 0.0
  %389 = vmatpush.msra.mxu0 0.0
  %390 = vmatpush.msra.mxu0 0.0
  %391 = vmatpush.msra.mxu0 0.0
  %392 = vmatpush.msra.mxu0 0.0
  %393 = vmatpush.msra.mxu0 0.0
  %394 = vmatpush.msra.mxu0 0.0
  %395 = vmatpush.msra.mxu0 0.0
  %396 = vmatpush.msra.mxu0 0.0
  %397 = vmatpush.msra.mxu0 0.0
  %398 = vmatpush.msra.mxu0 0.0
  %399 = vmatpush.msra.mxu0 %v378
  %400 = vmatpush.msra.mxu0 %v377
  %401 = vmatpush.msra.mxu0 %v376
  %402 = vmatpush.msra.mxu0 %v375
  %403 = vmatmul.f32.gmra.mxu0 %v385
  %v404 = vpop.f32.mrf.mxu0
  %v405 = vadd.f32 %v381, %v404
  %406 = vdwg.mxu0
  %v407 = vld [vmem:[%s1] sm:$0xff]
  %v408 = vmul.f32 %v405, 0.5
  %v409 = vmul.f32 %v408, 1.442695
  %v410 = vpow.pop %v409
  %412 = vrot.lane.b32.xlu0 %v410, 112
  %v413 = vpop.permute.xlu0 %412
  %v415 = vmul.f32 %v407, %v413
  %v416 = vadd.f32 %v415, %v405
  %v417 = vld [vmem:[%s12] sm:$0xff]
  %v418 = vld [vmem:[%s12 + $0x8] sm:$0xff]
  %v419 = vld [vmem:[%s13] sm:$0x1]
  %v421 = vperm.slane %v419, 0
  %vm423 = vcmask 130048
  %v425 = vsel %vm423, %v416, 0
  %427 = vmatpush.msra.mxu0 0.0
  %428 = vmatpush.msra.mxu0 0.0
  %429 = vmatpush.msra.mxu0 0.0
  %430 = vmatpush.msra.mxu0 0.0
  %431 = vmatpush.msra.mxu0 0.0
  %432 = vmatpush.msra.mxu0 0.0
  %433 = vmatpush.msra.mxu0 0.0
  %434 = vmatpush.msra.mxu0 0.0
  %435 = vmatpush.msra.mxu0 0.0
  %436 = vmatpush.msra.mxu0 0.0
  %437 = vmatpush.msra.mxu0 0.0
  %438 = vmatpush.msra.mxu0 0.0
  %439 = vmatpush.msra.mxu0 0.0
  %440 = vmatpush.msra.mxu0 0.0
  %441 = vmatpush.msra.mxu0 %v418
  %442 = vmatpush.msra.mxu0 %v417
  %443 = vmatmul.f32.gmra.mxu0 %v425
  %v444 = vpop.f32.mrf.mxu0
  %v445 = vadd.f32 %v421, %v444
  %446 = vdwg.mxu0
  %vm447 = vcmask 64512
  %v448 = vsel %vm447, %v445, -inf
  %449 = vmax.xlane.f32.xlu0 %v448
  %v450 = vpop.xlane.xlu0 %449
  %v451 = vsub.f32 %v445, %v450
  %v452 = vmul.f32 %v451, 1.442695
  %v453 = vpow.pop %v452
  %v454 = vsel %vm447, %v453, 0.0
  %455 = vadd.xlane.f32.xlu0 %v454
  %v456 = vpop.xlane.xlu0 %455
  %v457 = vlog2.pop %v456
  %v458 = vmul.f32 %v457, 0.6931472
  %v459 = vsub.f32 %v451, %v458
  %v460 = vld [vmem:[%s8] sm:$0xff]
  %v461 = vld [vmem:[%s8 + $0x8] sm:$0xff]
  %v462 = vld [vmem:[%s8 + $0x10] sm:$0xff]
  %v463 = vld [vmem:[%s8 + $0x18] sm:$0xff]
  %v464 = vld [vmem:[%s9] sm:$0x3]
  %v466 = vperm.slane %v464, 0
  %v467 = vperm.slane %v464, 1
  %470 = vmatpush.msra.mxu0 0.0
  %471 = vmatpush.msra.mxu0 0.0
  %472 = vmatpush.msra.mxu0 0.0
  %473 = vmatpush.msra.mxu0 0.0
  %474 = vmatpush.msra.mxu0 0.0
  %475 = vmatpush.msra.mxu0 0.0
  %476 = vmatpush.msra.mxu0 0.0
  %477 = vmatpush.msra.mxu0 0.0
  %478 = vmatpush.msra.mxu0 0.0
  %479 = vmatpush.msra.mxu0 0.0
  %480 = vmatpush.msra.mxu0 0.0
  %481 = vmatpush.msra.mxu0 0.0
  %482 = vmatpush.msra.mxu0 0.0
  %483 = vmatpush.msra.mxu0 0.0
  %484 = vmatpush.msra.mxu0 %v462
  %485 = vmatpush.msra.mxu0 %v460
  %486 = vmatmul.f32.gmra.mxu0 %v425
  %v487 = vpop.f32.mrf.mxu0
  %v488 = vadd.f32 %v466, %v487
  %489 = vdwg.mxu0
  %490 = vmatpush.msra.mxu0 0.0
  %491 = vmatpush.msra.mxu0 0.0
  %492 = vmatpush.msra.mxu0 0.0
  %493 = vmatpush.msra.mxu0 0.0
  %494 = vmatpush.msra.mxu0 0.0
  %495 = vmatpush.msra.mxu0 0.0
  %496 = vmatpush.msra.mxu0 0.0
  %497 = vmatpush.msra.mxu0 0.0
  %498 = vmatpush.msra.mxu0 0.0
  %499 = vmatpush.msra.mxu0 0.0
  %500 = vmatpush.msra.mxu0 0.0
  %501 = vmatpush.msra.mxu0 0.0
  %502 = vmatpush.msra.mxu0 0.0
  %503 = vmatpush.msra.mxu0 0.0
  %504 = vmatpush.msra.mxu0 %v463
  %505 = vmatpush.msra.mxu0 %v461
  %506 = vmatmul.f32.gmra.mxu0 %v425
  %v507 = vpop.f32.mrf.mxu0
  %v508 = vadd.f32 %v467, %v507
  %509 = vdwg.mxu0
  %v510 = vmul.f32 %v488, 0.5
  %v511 = vmul.f32 %v508, 0.5
  %v512 = vmul.f32 %v488, 0.70710677
  %v513 = vmul.f32 %v508, 0.70710677
  %v514 = vmul.f32 %v512, %v512
  %v515 = vmin.f32 16.0, %v514
  %v516 = vmul.f32 %v515, 2.1237322e-06
  %v517 = vadd.f32 %v516, 0.00028619796
  %v518 = vmul.f32 %v515, %v517
  %v519 = vadd.f32 %v518, 0.0036580483
  %v520 = vmul.f32 %v515, %v519
  %v521 = vadd.f32 %v520, 0.05243302
  %v522 = vmul.f32 %v515, %v521
  %v523 = vadd.f32 %v522, 0.18741608
  %v524 = vmul.f32 %v515, %v523
  %v525 = vadd.f32 %v524, 1.1283791
  %v526 = vmul.f32 %v512, %v525
  %v527 = vmul.f32 %v515, 3.8918573e-05
  %v528 = vadd.f32 %v527, 0.001143296
  %v529 = vmul.f32 %v515, %v528
  %v530 = vadd.f32 %v529, 0.014752088
  %v531 = vmul.f32 %v515, %v530
  %v532 = vadd.f32 %v531, 0.112945676
  %v533 = vmul.f32 %v515, %v532
  %v534 = vadd.f32 %v533, 0.4994258
  %v535 = vmul.f32 %v515, %v534
  %v536 = vadd.f32 %v535, 1.0
  %v537 = vrcp.pop %v536
  %v538 = vmul.f32 %v536, %v537
  %v539 = vsub.f32 1.0, %v538
  %v540 = vmul.f32 %v537, %v539
  %v541 = vadd.f32 %v537, %v540
  %vm542 = vweird.f32 %v536
  %vm543 = vweird.f32 %v537
  %vm544 = vmor %vm542, %vm543
  %v545 = vsel %vm544, %v537, %v541
  %v546 = vand.u32 2147483647, %v536
  %vm547 = vcmp.eq.f32.partialorder %v546, 8.507059e+37
  %v548 = vand.u32 %v536, 2147483648
  %v549 = vor.u32 1.1754944e-38, %v548
  %v550 = vsel %vm547, %v549, %v545
  %v551 = vmul.f32 %v526, %v550
  %v552 = vmin.f32 %v551, 1.0
  %v553 = vmax.f32 %v552, -1.0
  %v554 = vmul.f32 %v513, %v513
  %v555 = vmin.f32 16.0, %v554
  %v556 = vmul.f32 %v555, 2.1237322e-06
  %v557 = vadd.f32 %v556, 0.00028619796
  %v558 = vmul.f32 %v555, %v557
  %v559 = vadd.f32 %v558, 0.0036580483
  %v560 = vmul.f32 %v555, %v559
  %v561 = vadd.f32 %v560, 0.05243302
  %v562 = vmul.f32 %v555, %v561
  %v563 = vadd.f32 %v562, 0.18741608
  %v564 = vmul.f32 %v555, %v563
  %v565 = vadd.f32 %v564, 1.1283791
  %v566 = vmul.f32 %v513, %v565
  %v567 = vmul.f32 %v555, 3.8918573e-05
  %v568 = vadd.f32 %v567, 0.001143296
  %v569 = vmul.f32 %v555, %v568
  %v570 = vadd.f32 %v569, 0.014752088
  %v571 = vmul.f32 %v555, %v570
  %v572 = vadd.f32 %v571, 0.112945676
  %v573 = vmul.f32 %v555, %v572
  %v574 = vadd.f32 %v573, 0.4994258
  %v575 = vmul.f32 %v555, %v574
  %v576 = vadd.f32 %v575, 1.0
  %v577 = vrcp.pop %v576
  %v578 = vmul.f32 %v576, %v577
  %v579 = vsub.f32 1.0, %v578
  %v580 = vmul.f32 %v577, %v579
  %v581 = vadd.f32 %v577, %v580
  %vm582 = vweird.f32 %v576
  %vm583 = vweird.f32 %v577
  %vm584 = vmor %vm582, %vm583
  %v585 = vsel %vm584, %v577, %v581
  %v586 = vand.u32 2147483647, %v576
  %vm587 = vcmp.eq.f32.partialorder %v586, 8.507059e+37
  %v588 = vand.u32 %v576, 2147483648
  %v589 = vor.u32 1.1754944e-38, %v588
  %v590 = vsel %vm587, %v589, %v585
  %v591 = vmul.f32 %v566, %v590
  %v592 = vmin.f32 %v591, 1.0
  %v593 = vmax.f32 %v592, -1.0
  %v594 = vadd.f32 %v553, 1.0
  %v595 = vadd.f32 %v593, 1.0
  %v596 = vmul.f32 %v510, %v594
  %v597 = vmul.f32 %v511, %v595
  %v598 = vld [vmem:[%s10] sm:$0xff]
  %v599 = vld [vmem:[%s10 + $0x8] sm:$0xff]
  %v600 = vld [vmem:[%s10 + $0x10] sm:$0xff]
  %v601 = vld [vmem:[%s10 + $0x18] sm:$0xff]
  %v602 = vld [vmem:[%s10 + $0x20] sm:$0xff]
  %v603 = vld [vmem:[%s10 + $0x28] sm:$0xff]
  %v604 = vld [vmem:[%s10 + $0x30] sm:$0xff]
  %v605 = vld [vmem:[%s10 + $0x38] sm:$0xff]
  %v606 = vld [vmem:[%s10 + $0x40] sm:$0xff]
  %v607 = vld [vmem:[%s10 + $0x48] sm:$0xff]
  %v608 = vld [vmem:[%s10 + $0x50] sm:$0xff]
  %v609 = vld [vmem:[%s10 + $0x58] sm:$0xff]
  %v610 = vld [vmem:[%s10 + $0x60] sm:$0xff]
  %v611 = vld [vmem:[%s10 + $0x68] sm:$0xff]
  %v612 = vld [vmem:[%s10 + $0x70] sm:$0xff]
  %v613 = vld [vmem:[%s10 + $0x78] sm:$0xff]
  %v614 = vld [vmem:[%s10 + $0x80] sm:$0xff]
  %v615 = vld [vmem:[%s10 + $0x88] sm:$0xff]
  %v616 = vld [vmem:[%s10 + $0x90] sm:$0xff]
  %v617 = vld [vmem:[%s10 + $0x98] sm:$0xff]
  %v618 = vld [vmem:[%s10 + $0xa0] sm:$0xff]
  %v619 = vld [vmem:[%s10 + $0xa8] sm:$0xff]
  %v620 = vld [vmem:[%s10 + $0xb0] sm:$0xff]
  %v621 = vld [vmem:[%s10 + $0xb8] sm:$0xff]
  %v622 = vld [vmem:[%s10 + $0xc0] sm:$0xff]
  %v623 = vld [vmem:[%s11] sm:$0x1]
  %v625 = vperm.slane %v623, 0
  %v628 = vsel %vm208, %v597, 0
  %630 = vmatpush.msra.mxu0 %v613
  %631 = vmatpush.msra.mxu0 %v612
  %632 = vmatpush.msra.mxu0 %v611
  %633 = vmatpush.msra.mxu0 %v610
  %634 = vmatpush.msra.mxu0 %v609
  %635 = vmatpush.msra.mxu0 %v608
  %636 = vmatpush.msra.mxu0 %v607
  %637 = vmatpush.msra.mxu0 %v606
  %638 = vmatpush.msra.mxu0 %v605
  %639 = vmatpush.msra.mxu0 %v604
  %640 = vmatpush.msra.mxu0 %v603
  %641 = vmatpush.msra.mxu0 %v602
  %642 = vmatpush.msra.mxu0 %v601
  %643 = vmatpush.msra.mxu0 %v600
  %644 = vmatpush.msra.mxu0 %v599
  %645 = vmatpush.msra.mxu0 %v598
  %646 = vmatmul.f32.gmra.mxu0 %v596
  %v647 = vpop.f32.mrf.mxu0
  %v648 = vadd.f32 %v625, %v647
  %649 = vdwg.mxu0
  %650 = vmatpush.msra.mxu0 0.0
  %651 = vmatpush.msra.mxu0 0.0
  %652 = vmatpush.msra.mxu0 0.0
  %653 = vmatpush.msra.mxu0 0.0
  %654 = vmatpush.msra.mxu0 0.0
  %655 = vmatpush.msra.mxu0 0.0
  %656 = vmatpush.msra.mxu0 0.0
  %657 = vmatpush.msra.mxu0 %v622
  %658 = vmatpush.msra.mxu0 %v621
  %659 = vmatpush.msra.mxu0 %v620
  %660 = vmatpush.msra.mxu0 %v619
  %661 = vmatpush.msra.mxu0 %v618
  %662 = vmatpush.msra.mxu0 %v617
  %663 = vmatpush.msra.mxu0 %v616
  %664 = vmatpush.msra.mxu0 %v615
  %665 = vmatpush.msra.mxu0 %v614
  %666 = vmatmul.f32.gmra.mxu0 %v628
  %v667 = vpop.f32.mrf.mxu0
  %v668 = vadd.f32 %v648, %v667
  %669 = vdwg.mxu0
  %v670 = vxor.u32 %v668, 2147483648
  %v671 = vmul.f32 %v670, 1.442695
  %v672 = vpow.pop %v671
  %v673 = vadd.f32 %v672, 1.0
  %v674 = vrcp.pop %v673
  %v675 = vmul.f32 %v673, %v674
  %v676 = vsub.f32 1.0, %v675
  %v677 = vmul.f32 %v674, %v676
  %v678 = vadd.f32 %v674, %v677
  %vm679 = vweird.f32 %v673
  %vm680 = vweird.f32 %v674
  %vm681 = vmor %vm679, %vm680
  %v682 = vsel %vm681, %v674, %v678
  %v683 = vand.u32 2147483647, %v673
  %vm684 = vcmp.eq.f32.partialorder %v683, 8.507059e+37
  %v685 = vand.u32 %v673, 2147483648
  %v686 = vor.u32 1.1754944e-38, %v685
  %v687 = vsel %vm684, %v686, %v682
  %v688 = vmul.f32 1.0, %v687
  %690 = vrot.lane.b32.xlu0 %v405, 64
  %v691 = vpop.permute.xlu0 %690
  %693 = vrot.lane.b32.xlu0 %v416, 96
  %v694 = vpop.permute.xlu0 %693
  %697 = vrot.lane.b32.xlu0 %v459, 112
  %v698 = vpop.permute.xlu0 %697
  %v700 = vsel %vm76, %v688, %v691
  %vm701 = vcmask 654336
  %v702 = vsel %vm701, %v700, %v691
  %vm703 = vcmask 785408
  %v704 = vsel %vm703, %v702, %v694
  %vm705 = vcmask 916480
  %v706 = vsel %vm705, %v704, %v698
  %vm707 = vcmask 982016
  %v708 = vsel %vm707, %v706, 0.0
  %709 = vst [vmem:[%s16] sm:$0xff] %v708
  // Predicated region
  $region66: #{_vae_forward_impl.2} parent=0 // pred_check
    _
  $region67: #{_vae_forward_impl.2} parent=0 // pred_check_branch
    %711 = sbr.rel (0) target = $region69
  $region68: #{_vae_forward_impl.2} parent=0 // pred_region
    _
  $region69: #{_vae_forward_impl.2} parent=0 // pred_fallthru
    _
  // Predicated region
  $region70: #{_vae_forward_impl.2} parent=0 // pred_check
    _
  $region71: #{_vae_forward_impl.2} parent=0 // pred_check_branch
    %713 = sbr.rel (0) target = $region73
  $region72: #{_vae_forward_impl.2} parent=0 // pred_region
    _
  $region73: #{_vae_forward_impl.2} parent=0 // pred_fallthru
    _

</llo_original>
